<compile_context>
chip_gen: v7x
topology: tpu7x:2x2x1
jax: 0.10.0
libtpu: 0.0.40
codegen_flags: <defaults>
</compile_context>

<pallas_src>
import functools

import jax
import jax.numpy as jnp
from jax.experimental import pallas as pl
from jax.experimental.pallas import tpu as pltpu

_LANES = 128
_TARGET_BLOCK_BYTES = 4 * 1024 * 1024   # HBM moved per input block per grid step
_NUM_SPLITS = 2                         # leading "parallel" axis (megacore / v7x)


def _rel_mse_kernel(y_ref, t_ref, o_ref, acc_ref, *,
                    r: float, truncated: bool, threshold: float,
                    num_tiles: int, rem_last: int,
                    needs_mask: bool, has_dummy: bool):
    i = pl.program_id(1)                       # reduction ("arbitrary") axis
    steps = pl.num_programs(1)
    g = pl.program_id(0) * steps + i           # global row-block id

    @pl.when(i == 0)
    def _init():
        acc_ref[...] = jnp.zeros_like(acc_ref)

    y = y_ref[...].astype(jnp.float32)
    t = t_ref[...].astype(jnp.float32)
    if truncated:
        y = jnp.where(t < jnp.float32(threshold), jnp.maximum(y, 0.0), y)

    s = t + jnp.float32(r)
    d = y - t
    # (d / |s|)^2 == d*d * (1 / s^2): abs is redundant once squared, one EUP
    # reciprocal instead of divides.
    sq = (d * d) * pl.reciprocal(s * s)

    def _accumulate(vals):
        # (k*8, 128) -> (8, 128) with pure vreg-aligned VPU adds.
        acc_ref[...] += vals.reshape(-1, 8, _LANES).sum(axis=0)

    if needs_mask:
        # Only the last *real* block can contain padded / out-of-bounds lanes.
        is_tail = g == num_tiles - 1
        body_cond = jnp.logical_not(is_tail)
        if has_dummy:
            body_cond = jnp.logical_and(body_cond, g < num_tiles)

        @pl.when(body_cond)
        def _acc_body():
            _accumulate(sq)

        @pl.when(is_tail)
        def _acc_tail():
            # Static split: complete (8,128) groups go in unmasked; only one
            # vreg-sized group needs the iota mask.
            full_rows = (rem_last // (8 * _LANES)) * 8        # static
            tail_rem = rem_last - full_rows * _LANES          # static, < 1024
            if full_rows > 0:
                _accumulate(sq[:full_rows])
            if tail_rem > 0:
                grp = sq[full_rows:full_rows + 8]
                idx = (jax.lax.broadcasted_iota(jnp.int32, (8, _LANES), 0) * _LANES
                       + jax.lax.broadcasted_iota(jnp.int32, (8, _LANES), 1))
                acc_ref[...] += jnp.where(idx < tail_rem, grp, jnp.float32(0.0))
    else:
        if has_dummy:
            @pl.when(g < num_tiles)
            def _acc_body():
                _accumulate(sq)
        else:
            _accumulate(sq)

    @pl.when(i == steps - 1)
    def _finalize():
        # Lane-dense (8,128) output block; partial sum broadcast over the block.
        o_ref[...] = jnp.broadcast_to(jnp.sum(acc_ref[...]), o_ref.shape)


def relative_mse_loss(y: jax.Array, t: jax.Array, *,
                      r: float = 0.01,
                      truncated: bool = False,
                      threshold: float = 1e-06,
                      block_bytes: int = _TARGET_BLOCK_BYTES) -> jax.Array:
    """Pallas TPU implementation of RelativeMSELoss.forward (returns a scalar)."""
    assert y.shape == t.shape, "y and t must have the same shape"
    n_elem = int(y.size)
    assert n_elem > 0

    itemsize = max(jnp.dtype(y.dtype).itemsize, jnp.dtype(t.dtype).itemsize)
    # Dtype-aware row count so each block moves ~block_bytes of HBM.
    max_tile_rows = max(8, (block_bytes // (_LANES * itemsize)) // 8 * 8)

    rows = pl.cdiv(n_elem, _LANES)
    if rows <= max_tile_rows:
        tile_rows = ((rows + 7) // 8) * 8      # single block, sublane-aligned
        slab_rows = tile_rows
    else:
        tile_rows = max_tile_rows
        slab_rows = rows

    num_tiles = pl.cdiv(rows, tile_rows)
    num_splits = 1 if num_tiles == 1 else _NUM_SPLITS
    steps = pl.cdiv(num_tiles, num_splits)
    has_dummy = steps * num_splits != num_tiles

    needs_mask = num_tiles * tile_rows * _LANES != n_elem
    rem_last = n_elem - (num_tiles - 1) * tile_rows * _LANES   # static, >= 1

    padded = slab_rows * _LANES

    def _as_slab(x):
        flat = x.reshape(-1)                    # free for contiguous tensors
        if padded != n_elem:
            # TODO(synk): avoid this full-array copy for large misaligned sizes
            # by streaming the aligned prefix and handling the tail in JAX.
            flat = jnp.pad(flat, (0, padded - n_elem))
        return flat.reshape(slab_rows, _LANES)

    y2 = _as_slab(y)
    t2 = _as_slab(t)

    kernel = functools.partial(
        _rel_mse_kernel, r=float(r), truncated=bool(truncated),
        threshold=float(threshold), num_tiles=num_tiles, rem_last=rem_last,
        needs_mask=needs_mask, has_dummy=has_dummy)

    def _in_index(c, i):
        g = c * steps + i
        if has_dummy:
            g = jnp.minimum(g, num_tiles - 1)   # clamp the dummy tail step
        return (g, 0)

    bytes_accessed = (n_elem * (y.dtype.itemsize + t.dtype.itemsize)
                      + num_splits * 8 * _LANES * 4)
    cost = pl.CostEstimate(flops=8 * n_elem, transcendentals=n_elem,
                           bytes_accessed=bytes_accessed)

    # 2 inputs x 2 pipeline buffers + accumulator/output + headroom for
    # elementwise intermediates.  Explicit so v5e's 16 MiB default scoped limit
    # does not reject 4 MiB blocks, while staying well inside v7x's 64 MiB VMEM.
    vmem_limit = int(min(48 * 1024 * 1024,
                         4 * tile_rows * _LANES * itemsize + 24 * 1024 * 1024))

    out = pl.pallas_call(
        kernel,
        out_shape=jax.ShapeDtypeStruct((num_splits, 8, _LANES), jnp.float32),
        grid_spec=pltpu.PrefetchScalarGridSpec(
            num_scalar_prefetch=0,
            grid=(num_splits, steps),
            in_specs=[
                pl.BlockSpec((tile_rows, _LANES), _in_index),
                pl.BlockSpec((tile_rows, _LANES), _in_index),
            ],
            out_specs=pl.BlockSpec((1, 8, _LANES), lambda c, i: (c, 0, 0)),
            scratch_shapes=[pltpu.VMEM((8, _LANES), jnp.float32)],
        ),
        compiler_params=pltpu.CompilerParams(
            dimension_semantics=("parallel", "arbitrary"),
            vmem_limit_bytes=vmem_limit),
        cost_estimate=cost,
    )(y2, t2)

    partials = out[:, 0, 0]                     # one partial sum per split
    return jnp.sum(partials) / n_elem


def _reference(y, t, *, r=0.01, truncated=False, threshold=1e-06):
    y = y.astype(jnp.float32)
    t = t.astype(jnp.float32)
    if truncated:
        y = jnp.where(t < threshold, jnp.maximum(y, 0.0), y)
    scale = jnp.abs(t + r)
    return jnp.mean(((y / scale) - (t / scale)) ** 2)


if __name__ == "__main__":
    key = jax.random.PRNGKey(0)
    k_y, k_t = jax.random.split(key)

    # Small NCHW-like tensor (the loss is shape-agnostic).
    shape = (2, 4, 16, 16)
    y = jax.random.normal(k_y, shape, dtype=jnp.float32)
    t = jax.random.normal(k_t, shape, dtype=jnp.float32)

    loss = jax.block_until_ready(relative_mse_loss(y, t))
    ref = _reference(y, t)
    assert jnp.allclose(loss, ref, rtol=1e-5, atol=1e-5), (loss, ref)

    loss_tr = jax.block_until_ready(relative_mse_loss(y, t, truncated=True))
    ref_tr = _reference(y, t, truncated=True)
    assert jnp.allclose(loss_tr, ref_tr, rtol=1e-5, atol=1e-5), (loss_tr, ref_tr)

    # Non-128-divisible size -> masked tail group.
    shape_odd = (2, 3, 11, 5)  # 330 elements
    y_o = jax.random.normal(k_y, shape_odd, dtype=jnp.float32)
    t_o = jax.random.normal(k_t, shape_odd, dtype=jnp.float32)
    loss_o = jax.block_until_ready(relative_mse_loss(y_o, t_o))
    ref_o = _reference(y_o, t_o)
    assert jnp.allclose(loss_o, ref_o, rtol=1e-5, atol=1e-5), (loss_o, ref_o)

    # bf16 inputs exercise dtype-aware tile sizing + the in-kernel f32 cast.
    y_b = jax.random.normal(k_y, (4, 8, 32), dtype=jnp.float32).astype(jnp.bfloat16)
    t_b = jax.random.normal(k_t, (4, 8, 32), dtype=jnp.float32).astype(jnp.bfloat16)
    loss_b = jax.block_until_ready(relative_mse_loss(y_b, t_b))
    ref_b = _reference(y_b, t_b)
    assert jnp.allclose(loss_b, ref_b, rtol=1e-5, atol=1e-5), (loss_b, ref_b)

    # Multi-block input: two 4 MiB row-blocks split across the parallel axis,
    # boundary block masked in-kernel (well-conditioned data, looser tolerance
    # only because of f32 summation-order differences over ~1.1M elements).
    k1, k2 = jax.random.split(k_t)
    y_l = jax.random.normal(k1, (1024, 1100), dtype=jnp.float32)
    t_l = jax.random.uniform(k2, (1024, 1100), dtype=jnp.float32,
                             minval=0.5, maxval=1.5)
    loss_l = jax.block_until_ready(relative_mse_loss(y_l, t_l))
    ref_l = _reference(y_l, t_l)
    assert jnp.allclose(loss_l, ref_l, rtol=1e-4, atol=1e-6), (loss_l, ref_l)

    # Odd number of row-blocks exercises the clamped dummy step on the split
    # axis (small explicit block size keeps this case cheap to compile).
    y_d = jax.random.normal(k1, (300, 500), dtype=jnp.float32)
    t_d = jax.random.uniform(k2, (300, 500), dtype=jnp.float32,
                             minval=0.5, maxval=1.5)
    loss_d = jax.block_until_ready(
        relative_mse_loss(y_d, t_d, block_bytes=256 * 1024))
    ref_d = _reference(y_d, t_d)
    assert jnp.allclose(loss_d, ref_d, rtol=1e-4, atol=1e-6), (loss_d, ref_d)

    print("KERNEL_OK")
</pallas_src>

<mosaic_0001>
module attributes {stable_mosaic.version = 11 : i64} {
  func.func @_rel_mse_kernel(%arg0: i32, %arg1: i32, %arg2: memref<16x128xf32, #tpu.memory_space<vmem>>, %arg3: memref<16x128xf32, #tpu.memory_space<vmem>>, %arg4: memref<1x8x128xf32, #tpu.memory_space<vmem>>, %arg5: memref<8x128xf32, #tpu.memory_space<vmem>>) attributes {dimension_semantics = [#tpu.dimension_semantics<parallel>, #tpu.dimension_semantics<arbitrary>], iteration_bounds = array<i64: 1, 1>, scalar_prefetch = 0 : i64, scratch_operands = 1 : i64, tpu.core_type = #tpu.core_type<tc>, window_params = [{transform_indices = @transform_0, window_bounds = array<i64: 16, 128>}, {transform_indices = @transform_1, window_bounds = array<i64: 16, 128>}, {transform_indices = @transform_2, window_bounds = array<i64: 1, 8, 128>}]} {
    %c0_i32 = arith.constant 0 : i32
    %0 = arith.cmpi eq, %arg1, %c0_i32 : i32
    %1 = arith.extui %0 : i1 to i32
    %c0_i32_0 = arith.constant 0 : i32
    %2 = arith.cmpi ne, %1, %c0_i32_0 : i32
    scf.if %2 {
      %cst_11 = arith.constant 0.000000e+00 : f32
      %20 = vector.broadcast %cst_11 : f32 to vector<8x128xf32>
      %c0_12 = arith.constant 0 : index
      %c0_13 = arith.constant 0 : index
      %21 = vector.load %arg5[%c0_12, %c0_13] : memref<8x128xf32, #tpu.memory_space<vmem>>, vector<8x128xf32>
      tpu.vector_store %arg5[%c0_12, %c0_13], %20 {strides = array<i32>} : memref<8x128xf32, #tpu.memory_space<vmem>>, vector<8x128xf32>,
    } else {
    }
    %c0 = arith.constant 0 : index
    %c0_1 = arith.constant 0 : index
    %3 = vector.load %arg2[%c0, %c0_1] : memref<16x128xf32, #tpu.memory_space<vmem>>, vector<16x128xf32>
    %c0_2 = arith.constant 0 : index
    %c0_3 = arith.constant 0 : index
    %4 = vector.load %arg3[%c0_2, %c0_3] : memref<16x128xf32, #tpu.memory_space<vmem>>, vector<16x128xf32>
    %cst = arith.constant 0.00999999977 : f32
    %5 = vector.broadcast %cst : f32 to vector<16x128xf32>
    %6 = arith.addf %4, %5 : vector<16x128xf32>
    %7 = arith.subf %3, %4 : vector<16x128xf32>
    %8 = arith.mulf %7, %7 : vector<16x128xf32>
    %9 = arith.mulf %6, %6 : vector<16x128xf32>
    %10 = tpu.reciprocal %9 : vector<16x128xf32> -> vector<16x128xf32>
    %11 = arith.mulf %8, %10 : vector<16x128xf32>
    %c0_4 = arith.constant 0 : index
    %c0_5 = arith.constant 0 : index
    %12 = vector.load %arg5[%c0_4, %c0_5] : memref<8x128xf32, #tpu.memory_space<vmem>>, vector<8x128xf32>
    %13 = vector.shape_cast %11 : vector<16x128xf32> to vector<2x8x128xf32>
    %cst_6 = arith.constant dense<0.000000e+00> : vector<8x128xf32>
    %14 = vector.multi_reduction <add>, %13, %cst_6 [0] : vector<2x8x128xf32> to vector<8x128xf32>
    %15 = arith.addf %12, %14 : vector<8x128xf32>
    %c0_7 = arith.constant 0 : index
    %c0_8 = arith.constant 0 : index
    %16 = vector.load %arg5[%c0_7, %c0_8] : memref<8x128xf32, #tpu.memory_space<vmem>>, vector<8x128xf32>
    tpu.vector_store %arg5[%c0_7, %c0_8], %15 {strides = array<i32>} : memref<8x128xf32, #tpu.memory_space<vmem>>, vector<8x128xf32>,
    %c0_i32_9 = arith.constant 0 : i32
    %17 = arith.cmpi eq, %arg1, %c0_i32_9 : i32
    %18 = arith.extui %17 : i1 to i32
    %c0_i32_10 = arith.constant 0 : i32
    %19 = arith.cmpi ne, %18, %c0_i32_10 : i32
    scf.if %19 {
      %c0_11 = arith.constant 0 : index
      %c0_12 = arith.constant 0 : index
      %20 = vector.load %arg5[%c0_11, %c0_12] : memref<8x128xf32, #tpu.memory_space<vmem>>, vector<8x128xf32>
      %21 = vector.shape_cast %20 : vector<8x128xf32> to vector<1x8x128xf32>
      %cst_13 = arith.constant dense<0.000000e+00> : vector<1xf32>
      %22 = vector.multi_reduction <add>, %21, %cst_13 [1, 2] : vector<1x8x128xf32> to vector<1xf32>
      %23 = vector.shape_cast %22 : vector<1xf32> to vector<1x1x1xf32>
      %24 = vector.extract %23[0, 0, 0] : f32 from vector<1x1x1xf32>
      %25 = vector.broadcast %24 : f32 to vector<1x8x128xf32>
      %c0_14 = arith.constant 0 : index
      %c0_15 = arith.constant 0 : index
      %c0_16 = arith.constant 0 : index
      %26 = vector.load %arg4[%c0_14, %c0_15, %c0_16] : memref<1x8x128xf32, #tpu.memory_space<vmem>>, vector<1x8x128xf32>
      tpu.vector_store %arg4[%c0_14, %c0_15, %c0_16], %25 {strides = array<i32>} : memref<1x8x128xf32, #tpu.memory_space<vmem>>, vector<1x8x128xf32>,
    } else {
    }
    return
  }
  func.func @transform_0(%arg0: i32, %arg1: i32) -> (i32, i32) {
    %c1_i32 = arith.constant 1 : i32
    %0 = arith.muli %arg0, %c1_i32 : i32
    %1 = arith.addi %0, %arg1 : i32
    %c0_i32 = arith.constant 0 : i32
    %c0_i32_0 = arith.constant 0 : i32
    return %1, %c0_i32 : i32, i32
  }
  func.func @transform_1(%arg0: i32, %arg1: i32) -> (i32, i32) {
    %c1_i32 = arith.constant 1 : i32
    %0 = arith.muli %arg0, %c1_i32 : i32
    %1 = arith.addi %0, %arg1 : i32
    %c0_i32 = arith.constant 0 : i32
    %c0_i32_0 = arith.constant 0 : i32
    return %1, %c0_i32 : i32, i32
  }
  func.func @transform_2(%arg0: i32, %arg1: i32) -> (i32, i32, i32) {
    %c0_i32 = arith.constant 0 : i32
    %c0_i32_0 = arith.constant 0 : i32
    %c0_i32_1 = arith.constant 0 : i32
    return %arg0, %c0_i32, %c0_i32_0 : i32, i32, i32
  }
}

</mosaic_0001>

<llo_original>
// kernel: tpu_custom_call.1
$region0: #{tpu_custom_call.1}
  #allocation0 [shape = 'u32[]', space=smem, size = 0x4, offset = 0x4, fixed_abs, tag = 'smem constant byte address 0x4 - core index']
  #allocation1 [shape = 'u32[144,128]{1,0:T(1,128)}', space=vmem, size = 0x12000, scoped, tag = 'internal scratch']
  #allocation2 [shape = 'f32[8,128]{1,0:T(8,128)}', space=vmem, size = 0x1000, scoped, tag = 'scratch operand']
  %s0 = inlined_call_operand.hbm [shape: f32[16,128], index: 0, kind: input, shape index: {}]
  %s1 = inlined_call_operand.hbm [shape: f32[16,128], index: 1, kind: input, shape index: {}]
  %s2 = inlined_call_operand.hbm [shape: f32[1,8,128], index: 2, kind: output, shape index: {}]
  %s3 = sld [smem:[#allocation0]]
  $region34: #{tpu_custom_call.1} parent=0
    _
  %s5 = ssub.s32 1, %s3
  %s6 = scalar_select 0, %s5, %s3
  $region1: #{tpu_custom_call.1} parent=0
    #allocation3 [shape = 'u8[8192]{0}', space=vmem, size = 0x2000, scoped, tag = 'input window, operand 0, single buffered']
    #allocation4 [shape = 's32[1]{0}', space=sflag, size = 0x4, scoped, tag = 'scoped memory for tpu_custom_call.1']
    #allocation5 [shape = 's32[1]{0}', space=sflag, size = 0x4, scoped, tag = 'scoped memory for tpu_custom_call.1']
    #allocation6 [shape = 'u8[8192]{0}', space=vmem, size = 0x2000, scoped, tag = 'input window, operand 1, single buffered']
    #allocation7 [shape = 's32[1]{0}', space=sflag, size = 0x4, scoped, tag = 'scoped memory for tpu_custom_call.1']
    #allocation8 [shape = 'u8[4096]{0}', space=vmem, size = 0x1000, scoped, tag = 'output window, operand 0, single buffered']
    %7 = vsyncpa [#allocation4], 0
    %8 = vsyncpa [#allocation7], 0
    %9 = vsyncpa [#allocation5], 0
    // Predicated region
    $region2: #{tpu_custom_call.1} parent=1 // pred_check
      _
    $region3: #{tpu_custom_call.1} parent=1 // pred_check_branch
      %11 = sbr.rel (0) target = $region5
    $region4: #{tpu_custom_call.1} parent=1 // pred_region
      %s12 = sadd.s32 0, 0
      %s13 = smul.u32 2, %s12
      %s15 = ssub.s32 256, 256
      %16 = vsyncadd [#allocation4], %s15
      %s17 = smul.addr %s13, 128
      %s18 = scalar_lea.hbm %s0, %s17
      %s19 = sshll.u32 [#allocation3], 4
      %s20 = int_to_ptr.vmem [resolvable:$true] %s19
      %25 = dma.hbm_to_vmem [thread:$0]  %s18, 256, %s20, [#allocation4], 128, 128, 8
    $region5: #{tpu_custom_call.1} parent=1 // pred_fallthru
      _
    // Predicated region
    $region6: #{tpu_custom_call.1} parent=1 // pred_check
      _
    $region7: #{tpu_custom_call.1} parent=1 // pred_check_branch
      %27 = sbr.rel (0) target = $region9
    $region8: #{tpu_custom_call.1} parent=1 // pred_region
      %s28 = sadd.s32 0, 0
      %s29 = smul.u32 2, %s28
      %s31 = ssub.s32 256, 256
      %32 = vsyncadd [#allocation7], %s31
      %s33 = smul.addr %s29, 128
      %s34 = scalar_lea.hbm %s1, %s33
      %s35 = sshll.u32 [#allocation6], 4
      %s36 = int_to_ptr.vmem [resolvable:$true] %s35
      %41 = dma.hbm_to_vmem [thread:$0]  %s34, 256, %s36, [#allocation7], 128, 128, 8
    $region9: #{tpu_custom_call.1} parent=1 // pred_fallthru
      _
    // Predicated region
    $region10: #{tpu_custom_call.1} parent=1 // pred_check
      _
    $region11: #{tpu_custom_call.1} parent=1 // pred_check_branch
      %43 = sbr.rel (0) target = $region13
    $region12: #{tpu_custom_call.1} parent=1 // pred_region
      %44 = dma.done [#allocation4], 256
    $region13: #{tpu_custom_call.1} parent=1 // pred_fallthru
      _
    // Predicated region
    $region14: #{tpu_custom_call.1} parent=1 // pred_check
      _
    $region15: #{tpu_custom_call.1} parent=1 // pred_check_branch
      %46 = sbr.rel (0) target = $region17
    $region16: #{tpu_custom_call.1} parent=1 // pred_region
      %47 = dma.done [#allocation7], 256
    $region17: #{tpu_custom_call.1} parent=1 // pred_fallthru
      _
    %s48 = sadd.s32 0, 0
    %s49 = smul.u32 2, %s48
    %s50 = sadd.s32 0, 0
    %s51 = smul.u32 2, %s50
    %p52 = scmp.eq.s32.totalorder 0, 0
    // Predicated region
    $region18: #{tpu_custom_call.1} parent=1 // pred_check
      %p53 = pneg %p52
    $region19: #{tpu_custom_call.1} parent=1 // pred_check_branch
      %55 = sbr.rel (%p53) target = $region21
    $region20: #{tpu_custom_call.1} parent=1 // pred_region
      %56 = vst [vmem:[#allocation2] sm:$0xff] 0.0
    $region21: #{tpu_custom_call.1} parent=1 // pred_fallthru
      _
    %v57 = vld [vmem:[#allocation3] sm:$0xff]
    %v58 = vld [vmem:[#allocation3 + $0x8] sm:$0xff]
    %v59 = vld [vmem:[#allocation6] sm:$0xff]
    %v60 = vld [vmem:[#allocation6 + $0x8] sm:$0xff]
    %v61 = vadd.f32 %v59, 0.01
    %v62 = vadd.f32 %v60, 0.01
    %v63 = vsub.f32 %v57, %v59
    %v64 = vsub.f32 %v58, %v60
    %v65 = vmul.f32 %v63, %v63
    %v66 = vmul.f32 %v64, %v64
    %v67 = vmul.f32 %v61, %v61
    %v68 = vmul.f32 %v62, %v62
    %v69 = vrcp.pop %v67
    %v70 = vrcp.pop %v68
    %v71 = vmul.f32 %v65, %v69
    %v72 = vmul.f32 %v66, %v70
    %v73 = vld [vmem:[#allocation2] sm:$0xff]
    %v74 = vadd.f32 %v71, %v72
    %v75 = vadd.f32 %v73, %v74
    %76 = vst [vmem:[#allocation2] sm:$0xff] %v75
    // Predicated region
    $region22: #{tpu_custom_call.1} parent=1 // pred_check
      %p77 = pneg %p52
    $region23: #{tpu_custom_call.1} parent=1 // pred_check_branch
      %79 = sbr.rel (%p77) target = $region25
    $region24: #{tpu_custom_call.1} parent=1 // pred_region
      %v80 = vld [vmem:[#allocation2] sm:$0xff]
      %81 = vadd.xlane.f32.xlu0 %v80
      %v82 = vpop.xlane.xlu0 %81
      %v83 = vrot.slane %v82, 4
      %v84 = vadd.f32 %v82, %v83
      %v85 = vrot.slane %v84, 2
      %v86 = vadd.f32 %v84, %v85
      %v87 = vrot.slane %v86, 1
      %v88 = vadd.f32 %v86, %v87
      %s89 = vtos %v88
      %v90 = vstv %s89
      %91 = vst [vmem:[#allocation8] sm:$0xff] %v90
    $region25: #{tpu_custom_call.1} parent=1 // pred_fallthru
      _
    // Predicated region
    $region26: #{tpu_custom_call.1} parent=1 // pred_check
      _
    $region27: #{tpu_custom_call.1} parent=1 // pred_check_branch
      %93 = sbr.rel (0) target = $region29
    $region28: #{tpu_custom_call.1} parent=1 // pred_region
      %s95 = ssub.s32 128, 128
      %96 = vsyncadd [#allocation5], %s95
      %s98 = sshll.u32 [#allocation8], 4
      %s99 = int_to_ptr.vmem [resolvable:$true] %s98
      %101 = dma.vmem_to_hbm [thread:$0]  %s99, 128, %s2, [#allocation5]
    $region29: #{tpu_custom_call.1} parent=1 // pred_fallthru
      _
    // Predicated region
    $region30: #{tpu_custom_call.1} parent=1 // pred_check
      _
    $region31: #{tpu_custom_call.1} parent=1 // pred_check_branch
      %103 = sbr.rel (0) target = $region33
    $region32: #{tpu_custom_call.1} parent=1 // pred_region
      %104 = dma.done [#allocation5], 128
    $region33: #{tpu_custom_call.1} parent=1 // pred_fallthru
      _
    %105 = vsyncpa [#allocation4], 1
    %106 = vsyncpa [#allocation7], 1
    %107 = vsyncpa [#allocation5], 1

</llo_original>
